<compile_context>
chip_gen: v6e
topology: v6e:2x2x1
jax: 0.10.0
libtpu: 0.0.40
codegen_flags: <defaults>
</compile_context>

<pallas_src>
import functools

import jax
import jax.numpy as jnp
from jax.experimental import pallas as pl
from jax.experimental.pallas import tpu as pltpu

IN_DIM, HID_DIM, OUT_DIM = 198, 80, 6     # logical sizes (nn.Linear(198,80), nn.Linear(80,6))
HID_PAD, OUT_PAD = 128, 128               # lane-aligned padded sizes used inside the kernel
OUT_STORE = 8                             # lanes actually written back to HBM (>= OUT_DIM)
NEG_BIAS = -1e9                           # suppresses padded softmax lanes


def _round_up(x, m):
    return ((x + m - 1) // m) * m


def _reinforce_net_kernel(x_ref, w1_ref, b1_ref, w2_ref, b2_ref, out_ref):
    """softmax(relu(x @ w1 + b1) @ w2 + b2) over the lane (feature) axis.

    x_ref  : (TB, 198) f32     w1_ref : (198, 128) bf16   b1_ref : (1, 128) f32
    w2_ref : (128, 128) bf16   b2_ref : (1, 128) f32 (padded lanes = -1e9)
    out_ref: (TB, 8) f32 (only first 6 lanes meaningful)
    """
    # fc1: bf16 MXU matmul with f32 accumulation (cast fused into the kernel), bias + ReLU on VPU.
    x_bf16 = x_ref[...].astype(jnp.bfloat16)
    h = jnp.dot(x_bf16, w1_ref[...], preferred_element_type=jnp.float32)
    h = jnp.maximum(h + b1_ref[...], 0.0)                          # (TB, 128) f32

    # fc2: tiny 128x128 bf16 MXU matmul + bias; padded output lanes get -1e9.
    logits = jnp.dot(h.astype(jnp.bfloat16), w2_ref[...],
                     preferred_element_type=jnp.float32) + b2_ref[...]

    # Numerically stable softmax along lanes; padded lanes underflow to exactly 0 after exp.
    m = jnp.max(logits, axis=1, keepdims=True)
    e = jnp.exp(logits - m)
    denom = jnp.sum(e, axis=1, keepdims=True)
    probs = e / denom                                              # exact divide (HBM-bound anyway)

    # Lane-sliced store: only 8 lanes (32 B/row) are written back to HBM.
    out_ref[...] = probs[:, :OUT_STORE]


def _prepare_params(w1, b1, w2, b2):
    """Pad PyTorch-layout params (w: [out,in], b: [out]) into lane-aligned kernel layout."""
    w1_t = jnp.zeros((IN_DIM, HID_PAD), jnp.bfloat16).at[:, :HID_DIM].set(
        w1.T.astype(jnp.bfloat16))
    b1_p = jnp.zeros((1, HID_PAD), jnp.float32).at[0, :HID_DIM].set(b1.astype(jnp.float32))
    w2_t = jnp.zeros((HID_PAD, OUT_PAD), jnp.bfloat16).at[:HID_DIM, :OUT_DIM].set(
        w2.T.astype(jnp.bfloat16))
    b2_p = jnp.full((1, OUT_PAD), NEG_BIAS, jnp.float32).at[0, :OUT_DIM].set(
        b2.astype(jnp.float32))
    return w1_t, b1_p, w2_t, b2_p


@functools.partial(jax.jit, static_argnames=("block_b",))
def reinforce_net_forward(x, w1, b1, w2, b2, *, block_b=None):
    """x: (B, 198) f32.  w1: (80,198), b1: (80,), w2: (6,80), b2: (6,)  (PyTorch layout).

    Returns (B, 6) f32 softmax probabilities (matches ReinforceNet.forward).
    """
    B = x.shape[0]
    if block_b is None:
        # 4096 rows: x block ~3 MiB f32 (double-buffered ~8 MiB in VMEM layout) -- amortizes the
        # ~0.35 us/step grid overhead while staying far inside v7x's 64 MiB physical VMEM.
        block_b = min(4096, _round_up(B, 8))
    block_b = max(8, (block_b // 8) * 8)          # (8,128) sublane alignment

    w1_t, b1_p, w2_t, b2_p = _prepare_params(w1, b1, w2, b2)

    grid = (pl.cdiv(B, block_b),)                 # partial last tile handled by Pallas masking
    out = pl.pallas_call(
        _reinforce_net_kernel,
        out_shape=jax.ShapeDtypeStruct((B, OUT_STORE), jnp.float32),
        grid_spec=pltpu.PrefetchScalarGridSpec(
            num_scalar_prefetch=0,
            grid=grid,
            in_specs=[
                pl.BlockSpec((block_b, IN_DIM), lambda i: (i, 0)),   # x streams per batch tile
                pl.BlockSpec((IN_DIM, HID_PAD), lambda i: (0, 0)),   # weights: constant index_map
                pl.BlockSpec((1, HID_PAD), lambda i: (0, 0)),
                pl.BlockSpec((HID_PAD, OUT_PAD), lambda i: (0, 0)),
                pl.BlockSpec((1, OUT_PAD), lambda i: (0, 0)),
            ],
            out_specs=pl.BlockSpec((block_b, OUT_STORE), lambda i: (i, 0)),
        ),
        compiler_params=pltpu.CompilerParams(
            dimension_semantics=("parallel",),
            vmem_limit_bytes=48 * 1024 * 1024,    # above v5e's 16 MiB scoped default, < v7x physical
        ),
    )(x.astype(jnp.float32), w1_t, b1_p, w2_t, b2_p)

    return out[:, :OUT_DIM]


def init_params(key):
    """PyTorch nn.Linear default init (uniform +-1/sqrt(fan_in)), PyTorch layout."""
    k1, k2, k3, k4 = jax.random.split(key, 4)
    bound1 = 1.0 / jnp.sqrt(jnp.float32(IN_DIM))
    bound2 = 1.0 / jnp.sqrt(jnp.float32(HID_DIM))
    w1 = jax.random.uniform(k1, (HID_DIM, IN_DIM), jnp.float32, -bound1, bound1)
    b1 = jax.random.uniform(k2, (HID_DIM,), jnp.float32, -bound1, bound1)
    w2 = jax.random.uniform(k3, (OUT_DIM, HID_DIM), jnp.float32, -bound2, bound2)
    b2 = jax.random.uniform(k4, (OUT_DIM,), jnp.float32, -bound2, bound2)
    return w1, b1, w2, b2


def reference_forward_bf16(x, w1, b1, w2, b2):
    """Reference matching the kernel's bf16 MXU datapath (f32 accumulation + f32 elementwise)."""
    h = jnp.dot(x.astype(jnp.bfloat16), w1.T.astype(jnp.bfloat16),
                preferred_element_type=jnp.float32) + b1
    h = jnp.maximum(h, 0.0)
    logits = jnp.dot(h.astype(jnp.bfloat16), w2.T.astype(jnp.bfloat16),
                     preferred_element_type=jnp.float32) + b2
    return jax.nn.softmax(logits, axis=1)


def reference_forward_f32(x, w1, b1, w2, b2):
    """Pure-f32 reference of the original PyTorch module semantics."""
    h = jnp.maximum(x @ w1.T + b1, 0.0)
    logits = h @ w2.T + b2
    return jax.nn.softmax(logits, axis=1)


# TODO(synk): eligibility-trace TD(lambda) update / select_action are host-side training logic
# (autograd + argmax over expected values), not part of forward(); not translated to Pallas.

if __name__ == "__main__":
    key = jax.random.PRNGKey(0)
    kx, kp = jax.random.split(key)

    B = 24  # small batch of encoded backgammon boards (198-dim each); block_b=8 -> 3 grid steps
    x = jax.random.normal(kx, (B, IN_DIM), jnp.float32)
    w1, b1, w2, b2 = init_params(kp)

    probs = reinforce_net_forward(x, w1, b1, w2, b2, block_b=8)
    probs = jax.block_until_ready(probs)

    ref_bf16 = reference_forward_bf16(x, w1, b1, w2, b2)
    ref_f32 = reference_forward_f32(x, w1, b1, w2, b2)

    assert probs.shape == (B, OUT_DIM)
    # Exact divide -> rows sum to 1 up to f32 rounding.
    assert jnp.allclose(jnp.sum(probs, axis=1), 1.0, atol=1e-3)
    # Matches the bf16-MXU reference tightly, and the f32 module semantics loosely.
    assert jnp.allclose(probs, ref_bf16, atol=2e-3, rtol=2e-3)
    assert jnp.allclose(probs, ref_f32, atol=3e-2, rtol=3e-2)

    print("KERNEL_OK")
</pallas_src>

<mosaic_0001>
module attributes {stable_mosaic.version = 11 : i64} {
  func.func @_reinforce_net_kernel(%arg0: i32, %arg1: memref<8x198xf32, #tpu.memory_space<vmem>>, %arg2: memref<198x128xbf16, #tpu.memory_space<vmem>>, %arg3: memref<1x128xf32, #tpu.memory_space<vmem>>, %arg4: memref<128x128xbf16, #tpu.memory_space<vmem>>, %arg5: memref<1x128xf32, #tpu.memory_space<vmem>>, %arg6: memref<8x8xf32, #tpu.memory_space<vmem>>) attributes {dimension_semantics = [#tpu.dimension_semantics<parallel>], iteration_bounds = array<i64: 3>, scalar_prefetch = 0 : i64, scratch_operands = 0 : i64, tpu.core_type = #tpu.core_type<tc>, window_params = [{transform_indices = @transform_0, window_bounds = array<i64: 8, 198>}, {pipeline_mode = #tpu.pipeline_mode<synchronous>, transform_indices = @transform_1, window_bounds = array<i64: 198, 128>}, {pipeline_mode = #tpu.pipeline_mode<synchronous>, transform_indices = @transform_2, window_bounds = array<i64: 1, 128>}, {pipeline_mode = #tpu.pipeline_mode<synchronous>, transform_indices = @transform_3, window_bounds = array<i64: 128, 128>}, {pipeline_mode = #tpu.pipeline_mode<synchronous>, transform_indices = @transform_4, window_bounds = array<i64: 1, 128>}, {transform_indices = @transform_5, window_bounds = array<i64: 8, 8>}]} {
    %c0 = arith.constant 0 : index
    %c0_0 = arith.constant 0 : index
    %0 = vector.load %arg1[%c0, %c0_0] : memref<8x198xf32, #tpu.memory_space<vmem>>, vector<8x198xf32>
    %1 = arith.truncf %0 : vector<8x198xf32> to vector<8x198xbf16>
    %c0_1 = arith.constant 0 : index
    %c0_2 = arith.constant 0 : index
    %2 = vector.load %arg2[%c0_1, %c0_2] : memref<198x128xbf16, #tpu.memory_space<vmem>>, vector<198x128xbf16>
    %cst = arith.constant dense<0.000000e+00> : vector<8x128xf32>
    %3 = tpu.matmul %1, %2, %cst {dimension_numbers = #tpu.dot_dimension_numbers<[1], [0], [0], [1], [0, 0, 1, 1], [], []>} : vector<8x198xbf16>, vector<198x128xbf16>, vector<8x128xf32> -> vector<8x128xf32>
    %c0_3 = arith.constant 0 : index
    %c0_4 = arith.constant 0 : index
    %4 = vector.load %arg3[%c0_3, %c0_4] : memref<1x128xf32, #tpu.memory_space<vmem>>, vector<1x128xf32>
    %5 = vector.broadcast %4 : vector<1x128xf32> to vector<8x128xf32>
    %6 = arith.addf %3, %5 : vector<8x128xf32>
    %cst_5 = arith.constant 0.000000e+00 : f32
    %7 = vector.broadcast %cst_5 : f32 to vector<8x128xf32>
    %8 = arith.maximumf %6, %7 : vector<8x128xf32>
    %9 = arith.truncf %8 : vector<8x128xf32> to vector<8x128xbf16>
    %c0_6 = arith.constant 0 : index
    %c0_7 = arith.constant 0 : index
    %10 = vector.load %arg4[%c0_6, %c0_7] : memref<128x128xbf16, #tpu.memory_space<vmem>>, vector<128x128xbf16>
    %cst_8 = arith.constant dense<0.000000e+00> : vector<8x128xf32>
    %11 = tpu.matmul %9, %10, %cst_8 {dimension_numbers = #tpu.dot_dimension_numbers<[1], [0], [0], [1], [0, 0, 1, 1], [], []>} : vector<8x128xbf16>, vector<128x128xbf16>, vector<8x128xf32> -> vector<8x128xf32>
    %c0_9 = arith.constant 0 : index
    %c0_10 = arith.constant 0 : index
    %12 = vector.load %arg5[%c0_9, %c0_10] : memref<1x128xf32, #tpu.memory_space<vmem>>, vector<1x128xf32>
    %13 = vector.broadcast %12 : vector<1x128xf32> to vector<8x128xf32>
    %14 = arith.addf %11, %13 : vector<8x128xf32>
    %cst_11 = arith.constant dense<0xFF800000> : vector<8xf32>
    %15 = vector.multi_reduction <maximumf>, %14, %cst_11 [1] : vector<8x128xf32> to vector<8xf32>
    %16 = vector.shape_cast %15 : vector<8xf32> to vector<8x1xf32>
    %17 = vector.broadcast %16 : vector<8x1xf32> to vector<8x128xf32>
    %18 = arith.subf %14, %17 : vector<8x128xf32>
    %19 = math.exp %18 : vector<8x128xf32>
    %cst_12 = arith.constant dense<0.000000e+00> : vector<8xf32>
    %20 = vector.multi_reduction <add>, %19, %cst_12 [1] : vector<8x128xf32> to vector<8xf32>
    %21 = vector.shape_cast %20 : vector<8xf32> to vector<8x1xf32>
    %22 = vector.broadcast %21 : vector<8x1xf32> to vector<8x128xf32>
    %23 = arith.divf %19, %22 : vector<8x128xf32>
    %24 = vector.extract_strided_slice %23 {offsets = [0, 0], sizes = [8, 8], strides = [1, 1]} : vector<8x128xf32> to vector<8x8xf32>
    %c0_13 = arith.constant 0 : index
    %c0_14 = arith.constant 0 : index
    %25 = vector.load %arg6[%c0_13, %c0_14] : memref<8x8xf32, #tpu.memory_space<vmem>>, vector<8x8xf32>
    tpu.vector_store %arg6[%c0_13, %c0_14], %24 {strides = array<i32>} : memref<8x8xf32, #tpu.memory_space<vmem>>, vector<8x8xf32>,
    return
  }
  func.func @transform_0(%arg0: i32) -> (i32, i32) {
    %c0_i32 = arith.constant 0 : i32
    %c0_i32_0 = arith.constant 0 : i32
    return %arg0, %c0_i32 : i32, i32
  }
  func.func @transform_1(%arg0: i32) -> (i32, i32) {
    %c0_i32 = arith.constant 0 : i32
    %c0_i32_0 = arith.constant 0 : i32
    %c0_i32_1 = arith.constant 0 : i32
    return %c0_i32, %c0_i32_0 : i32, i32
  }
  func.func @transform_2(%arg0: i32) -> (i32, i32) {
    %c0_i32 = arith.constant 0 : i32
    %c0_i32_0 = arith.constant 0 : i32
    %c0_i32_1 = arith.constant 0 : i32
    return %c0_i32, %c0_i32_0 : i32, i32
  }
  func.func @transform_3(%arg0: i32) -> (i32, i32) {
    %c0_i32 = arith.constant 0 : i32
    %c0_i32_0 = arith.constant 0 : i32
    %c0_i32_1 = arith.constant 0 : i32
    return %c0_i32, %c0_i32_0 : i32, i32
  }
  func.func @transform_4(%arg0: i32) -> (i32, i32) {
    %c0_i32 = arith.constant 0 : i32
    %c0_i32_0 = arith.constant 0 : i32
    %c0_i32_1 = arith.constant 0 : i32
    return %c0_i32, %c0_i32_0 : i32, i32
  }
  func.func @transform_5(%arg0: i32) -> (i32, i32) {
    %c0_i32 = arith.constant 0 : i32
    %c0_i32_0 = arith.constant 0 : i32
    return %arg0, %c0_i32 : i32, i32
  }
}

</mosaic_0001>

<llo_original>
// kernel: reinforce_net_forward.1
$region0: #{reinforce_net_forward.1}
  #allocation0 [shape = 'u32[]', space=smem, size = 0x4, offset = 0x4, fixed_abs, tag = 'smem constant byte address 0x4 - core index']
  #allocation1 [shape = 'u32[144,128]{1,0:T(1,128)}', space=vmem, size = 0x12000, scoped, tag = 'internal scratch']
  %s0 = inlined_call_operand.vmem [shape: f32[24,198], index: 0, kind: input, shape index: {}]
  %s1 = inlined_call_operand.vmem [shape: bf16[198,128], index: 1, kind: input, shape index: {}]
  %s2 = inlined_call_operand.vmem [shape: f32[1,128], index: 2, kind: input, shape index: {}]
  %s3 = inlined_call_operand.vmem [shape: bf16[128,128], index: 3, kind: input, shape index: {}]
  %s4 = inlined_call_operand.vmem [shape: f32[1,128], index: 4, kind: input, shape index: {}]
  %s5 = inlined_call_operand.vmem [shape: f32[24,8], index: 5, kind: output, shape index: {}]
  %s6 = sld [smem:[#allocation0]]
  $region53: #{reinforce_net_forward.1} parent=0
    _
  %s8 = ssub.s32 1, %s6
  %s9 = scalar_select 0, %s8, %s6
  loop: start=0, step=1, limit=5
  $region2: #{reinforce_net_forward.1} parent=0 // loop_pre_header
    _
  $region3: #{reinforce_net_forward.1} parent=0 // loop_header
    %s11 = sphi 0, %s15
    %p12 = scmp.ge.s32.totalorder %s11, 5
    %s21 = sphi 0, %s23
    %s24 = sphi 0, %s21
    %s25 = sphi 0, %s24
    %s41 = sphi 0, %s25
    %s45 = sphi 0, %s45
    %s47 = sphi 0, %s45
    %s48 = sphi 0, %s47
    %s62 = sphi 0, %s48
    %s66 = sphi 0, %s66
    %s68 = sphi 0, %s66
    %s69 = sphi 0, %s68
    %s83 = sphi 0, %s69
    %s87 = sphi 0, %s87
    %s89 = sphi 0, %s87
    %s90 = sphi 0, %s89
    %s104 = sphi 0, %s90
    %s108 = sphi 0, %s108
    %s110 = sphi 0, %s108
    %s111 = sphi 0, %s110
    %s125 = sphi 0, %s111
    %s131 = sphi 0, %s133
    %s134 = sphi 0, %s131
    %s135 = sphi 0, %s134
    %s151 = sphi 0, %s135
  $region4: #{reinforce_net_forward.1} parent=0 // loop_header_branch
    %14 = sbr.rel (%p12) target = $region8
  $region5: #{reinforce_net_forward.1} parent=0 // loop_body
    %s16 = ssub.s32 %s11, 1
    %s17 = ssub.s32 %s11, 2
    %s18 = sadd.s32 %s11, 1
    %s19 = ssub.s32 %s11, %s18
    %p20 = scmp.eq.s32.totalorder %s19, 0
    %s22 = sadd.s32 %s21, 1
    %s23 = scalar_select %p20, %s21, %s22
    %p26 = pneg %p20
    %p27 = scmp.eq.s32.totalorder %s11, 2
    %p28 = por %p26, %p27
    %p29 = scmp.ne.s32.totalorder %s21, %s24
    %p30 = scmp.eq.s32.totalorder %s11, 0
    %p31 = por %p29, %p30
    %p32 = scmp.ne.s32.totalorder %s21, %s24
    %p33 = scmp.eq.s32.totalorder %s16, 2
    %p34 = por %p32, %p33
    %p35 = scmp.ne.s32.totalorder %s24, %s25
    %p36 = scmp.eq.s32.totalorder %s16, 0
    %p37 = por %p35, %p36
    %p38 = scmp.ne.s32.totalorder %s24, %s25
    %p39 = scmp.eq.s32.totalorder %s17, 2
    %p40 = por %p38, %p39
    %p42 = scmp.ne.s32.totalorder %s25, %s41
    %p43 = scmp.eq.s32.totalorder %s17, 0
    %p44 = por %p42, %p43
    %s46 = sadd.s32 %s45, 1
    %p49 = scmp.eq.s32.totalorder %s11, 2
    %p50 = scmp.ne.s32.totalorder %s45, %s47
    %p51 = scmp.eq.s32.totalorder %s11, 0
    %p52 = por %p50, %p51
    %p53 = scmp.ne.s32.totalorder %s45, %s47
    %p54 = scmp.eq.s32.totalorder %s16, 2
    %p55 = por %p53, %p54
    %p56 = scmp.ne.s32.totalorder %s47, %s48
    %p57 = scmp.eq.s32.totalorder %s16, 0
    %p58 = por %p56, %p57
    %p59 = scmp.ne.s32.totalorder %s47, %s48
    %p60 = scmp.eq.s32.totalorder %s17, 2
    %p61 = por %p59, %p60
    %p63 = scmp.ne.s32.totalorder %s48, %s62
    %p64 = scmp.eq.s32.totalorder %s17, 0
    %p65 = por %p63, %p64
    %s67 = sadd.s32 %s66, 1
    %p70 = scmp.eq.s32.totalorder %s11, 2
    %p71 = scmp.ne.s32.totalorder %s66, %s68
    %p72 = scmp.eq.s32.totalorder %s11, 0
    %p73 = por %p71, %p72
    %p74 = scmp.ne.s32.totalorder %s66, %s68
    %p75 = scmp.eq.s32.totalorder %s16, 2
    %p76 = por %p74, %p75
    %p77 = scmp.ne.s32.totalorder %s68, %s69
    %p78 = scmp.eq.s32.totalorder %s16, 0
    %p79 = por %p77, %p78
    %p80 = scmp.ne.s32.totalorder %s68, %s69
    %p81 = scmp.eq.s32.totalorder %s17, 2
    %p82 = por %p80, %p81
    %p84 = scmp.ne.s32.totalorder %s69, %s83
    %p85 = scmp.eq.s32.totalorder %s17, 0
    %p86 = por %p84, %p85
    %s88 = sadd.s32 %s87, 1
    %p91 = scmp.eq.s32.totalorder %s11, 2
    %p92 = scmp.ne.s32.totalorder %s87, %s89
    %p93 = scmp.eq.s32.totalorder %s11, 0
    %p94 = por %p92, %p93
    %p95 = scmp.ne.s32.totalorder %s87, %s89
    %p96 = scmp.eq.s32.totalorder %s16, 2
    %p97 = por %p95, %p96
    %p98 = scmp.ne.s32.totalorder %s89, %s90
    %p99 = scmp.eq.s32.totalorder %s16, 0
    %p100 = por %p98, %p99
    %p101 = scmp.ne.s32.totalorder %s89, %s90
    %p102 = scmp.eq.s32.totalorder %s17, 2
    %p103 = por %p101, %p102
    %p105 = scmp.ne.s32.totalorder %s90, %s104
    %p106 = scmp.eq.s32.totalorder %s17, 0
    %p107 = por %p105, %p106
    %s109 = sadd.s32 %s108, 1
    %p112 = scmp.eq.s32.totalorder %s11, 2
    %p113 = scmp.ne.s32.totalorder %s108, %s110
    %p114 = scmp.eq.s32.totalorder %s11, 0
    %p115 = por %p113, %p114
    %p116 = scmp.ne.s32.totalorder %s108, %s110
    %p117 = scmp.eq.s32.totalorder %s16, 2
    %p118 = por %p116, %p117
    %p119 = scmp.ne.s32.totalorder %s110, %s111
    %p120 = scmp.eq.s32.totalorder %s16, 0
    %p121 = por %p119, %p120
    %p122 = scmp.ne.s32.totalorder %s110, %s111
    %p123 = scmp.eq.s32.totalorder %s17, 2
    %p124 = por %p122, %p123
    %p126 = scmp.ne.s32.totalorder %s111, %s125
    %p127 = scmp.eq.s32.totalorder %s17, 0
    %p128 = por %p126, %p127
    %s129 = ssub.s32 %s11, %s18
    %p130 = scmp.eq.s32.totalorder %s129, 0
    %s132 = sadd.s32 %s131, 1
    %s133 = scalar_select %p130, %s131, %s132
    %p136 = pneg %p130
    %p137 = scmp.eq.s32.totalorder %s11, 2
    %p138 = por %p136, %p137
    %p139 = scmp.ne.s32.totalorder %s131, %s134
    %p140 = scmp.eq.s32.totalorder %s11, 0
    %p141 = por %p139, %p140
    %p142 = scmp.ne.s32.totalorder %s131, %s134
    %p143 = scmp.eq.s32.totalorder %s16, 2
    %p144 = por %p142, %p143
    %p145 = scmp.ne.s32.totalorder %s134, %s135
    %p146 = scmp.eq.s32.totalorder %s16, 0
    %p147 = por %p145, %p146
    %p148 = scmp.ne.s32.totalorder %s134, %s135
    %p149 = scmp.eq.s32.totalorder %s17, 2
    %p150 = por %p148, %p149
    %p152 = scmp.ne.s32.totalorder %s135, %s151
    %p153 = scmp.eq.s32.totalorder %s17, 0
    %p154 = por %p152, %p153
    %p155 = scmp.le.s32.totalorder 1, %s11
    %p156 = scmp.lt.s32.totalorder %s11, 4
    %p157 = pnand %p155, %p156
    %p158 = pneg %p157
    // Predicated region
    $region9: #{reinforce_net_forward.1} parent=5 // pred_check
      _
    $region10: #{reinforce_net_forward.1} parent=5 // pred_check_branch
      %160 = sbr.rel (%p157) target = $region12
    $region11: #{reinforce_net_forward.1} parent=5 // pred_region
      %s161 = ssub.s32 %s11, 1
      // Predicated region
      $region13: #{reinforce_net_forward.1} parent=11 // pred_check
        %p162 = pneg %p58
      $region14: #{reinforce_net_forward.1} parent=11 // pred_check_branch
        %164 = sbr.rel (%p162) target = $region16
      $region15: #{reinforce_net_forward.1} parent=11 // pred_region
        _
      $region16: #{reinforce_net_forward.1} parent=11 // pred_fallthru
        _
      // Predicated region
      $region17: #{reinforce_net_forward.1} parent=11 // pred_check
        %p165 = pneg %p79
      $region18: #{reinforce_net_forward.1} parent=11 // pred_check_branch
        %167 = sbr.rel (%p165) target = $region20
      $region19: #{reinforce_net_forward.1} parent=11 // pred_region
        _
      $region20: #{reinforce_net_forward.1} parent=11 // pred_fallthru
        _
      // Predicated region
      $region21: #{reinforce_net_forward.1} parent=11 // pred_check
        %p168 = pneg %p100
      $region22: #{reinforce_net_forward.1} parent=11 // pred_check_branch
        %170 = sbr.rel (%p168) target = $region24
      $region23: #{reinforce_net_forward.1} parent=11 // pred_region
        _
      $region24: #{reinforce_net_forward.1} parent=11 // pred_fallthru
        _
      // Predicated region
      $region25: #{reinforce_net_forward.1} parent=11 // pred_check
        %p171 = pneg %p121
      $region26: #{reinforce_net_forward.1} parent=11 // pred_check_branch
        %173 = sbr.rel (%p171) target = $region28
      $region27: #{reinforce_net_forward.1} parent=11 // pred_region
        _
      $region28: #{reinforce_net_forward.1} parent=11 // pred_fallthru
        _
    $region12: #{reinforce_net_forward.1} parent=5 // pred_fallthru
      _
    %p174 = scmp.lt.s32.totalorder %s11, 3
    // Predicated region
    $region29: #{reinforce_net_forward.1} parent=5 // pred_check
      %p175 = pneg %p174
    $region30: #{reinforce_net_forward.1} parent=5 // pred_check_branch
      %177 = sbr.rel (%p175) target = $region32
    $region31: #{reinforce_net_forward.1} parent=5 // pred_region
      // Predicated region
      $region33: #{reinforce_net_forward.1} parent=31 // pred_check
        %p178 = pneg %p31
      $region34: #{reinforce_net_forward.1} parent=31 // pred_check_branch
        %180 = sbr.rel (%p178) target = $region36
      $region35: #{reinforce_net_forward.1} parent=31 // pred_region
        %p181 = scmp.lt.s32.totalorder %s11, 2
        %s182 = scalar_select %p181, %s11, 2
        %s183 = smul.addr %s182, 2
        %s184 = smul.addr %s183, 8
        %s185 = scalar_lea.vmem %s0, %s184
      $region36: #{reinforce_net_forward.1} parent=31 // pred_fallthru
        _
    $region32: #{reinforce_net_forward.1} parent=5 // pred_fallthru
      _
    %p186 = scmp.le.s32.totalorder 1, %s11
    %p187 = scmp.lt.s32.totalorder %s11, 4
    %p188 = pnand %p186, %p187
    %p189 = pneg %p188
    // Predicated region
    $region37: #{reinforce_net_forward.1} parent=5 // pred_check
      _
    $region38: #{reinforce_net_forward.1} parent=5 // pred_check_branch
      %191 = sbr.rel (%p188) target = $region40
    $region39: #{reinforce_net_forward.1} parent=5 // pred_region
      %s192 = ssub.s32 %s11, 1
      %p193 = scmp.lt.s32.totalorder %s16, 2
      %s194 = scalar_select %p193, %s16, 2
      %s195 = smul.addr %s194, 2
      %s196 = smul.addr %s195, 8
      %s197 = scalar_lea.vmem %s0, %s196
      %p198 = pneg %p37
      %p199 = pneg %p34
      %p200 = pneg %p58
      %p201 = pneg %p55
      %p202 = pneg %p79
      %p203 = pneg %p76
      %p204 = pneg %p100
      %p205 = pneg %p97
      %p206 = pneg %p121
      %p207 = pneg %p118
      %p208 = pneg %p147
      %p209 = pneg %p144
      %p210 = scmp.lt.s32.totalorder %s16, 2
      %s211 = scalar_select %p210, %s16, 2
      %s212 = smul.addr %s211, 8
      %s213 = scalar_lea.vmem %s5, %s212
      %p214 = scmp.lt.s32.totalorder %s16, 2
      %s215 = scalar_select %p214, %s16, 2
      %s216 = smul.addr %s215, 2
      %s217 = smul.addr %s216, 8
      %s218 = scalar_lea.vmem %s0, %s217
      %p219 = scmp.lt.s32.totalorder %s16, 2
      %s220 = scalar_select %p219, %s16, 2
      %s221 = smul.addr %s220, 8
      %s222 = scalar_lea.vmem %s5, %s221
      %v224 = vld [vmem:[%s218] sm:$0xff]
      %v225 = vld [vmem:[%s218 + $0x8] sm:$0xff]
      %v226 = vpack.c.bf16 %v224, %v224
      %v227 = vpack.c.bf16 %v225, %v225
      %v228 = vld [vmem:[%s1] sm:$0xf]
      %v229 = vld [vmem:[%s1 + $0x4] sm:$0xf]
      %v230 = vld [vmem:[%s1 + $0x8] sm:$0xf]
      %v231 = vld [vmem:[%s1 + $0xc] sm:$0xf]
      %v232 = vld [vmem:[%s1 + $0x10] sm:$0xf]
      %v233 = vld [vmem:[%s1 + $0x14] sm:$0xf]
      %v234 = vld [vmem:[%s1 + $0x18] sm:$0xf]
      %v235 = vld [vmem:[%s1 + $0x1c] sm:$0xf]
      %v236 = vld [vmem:[%s1 + $0x20] sm:$0xf]
      %v237 = vld [vmem:[%s1 + $0x24] sm:$0xf]
      %v238 = vld [vmem:[%s1 + $0x28] sm:$0xf]
      %v239 = vld [vmem:[%s1 + $0x2c] sm:$0xf]
      %v240 = vld [vmem:[%s1 + $0x30] sm:$0xf]
      %v241 = vld [vmem:[%s1 + $0x34] sm:$0xf]
      %v242 = vld [vmem:[%s1 + $0x38] sm:$0xf]
      %v243 = vld [vmem:[%s1 + $0x3c] sm:$0xf]
      %v244 = vld [vmem:[%s1 + $0x40] sm:$0xf]
      %v245 = vld [vmem:[%s1 + $0x44] sm:$0xf]
      %v246 = vld [vmem:[%s1 + $0x48] sm:$0xf]
      %v247 = vld [vmem:[%s1 + $0x4c] sm:$0xf]
      %v248 = vld [vmem:[%s1 + $0x50] sm:$0xf]
      %v249 = vld [vmem:[%s1 + $0x54] sm:$0xf]
      %v250 = vld [vmem:[%s1 + $0x58] sm:$0xf]
      %v251 = vld [vmem:[%s1 + $0x5c] sm:$0xf]
      %v252 = vld [vmem:[%s1 + $0x60] sm:$0x7]
      %v253 = vld [vmem:[%s2] sm:$0x1]
      %v255 = vlaneseq
      %v256 = vshrl.u32 %v255, 7
      %v257 = vsub.s32 0, %v256
      %v258 = vrot.slane %v253, %v257
      %v285 = vunpack.c.l.b16 %v228
      %v286 = vunpack.c.l.b16 %v229
      %v287 = vunpack.c.l.b16 %v230
      %v288 = vunpack.c.l.b16 %v231
      %v289 = vunpack.c.l.b16 %v232
      %v290 = vunpack.c.l.b16 %v233
      %v291 = vunpack.c.l.b16 %v234
      %v292 = vunpack.c.l.b16 %v235
      %v293 = vunpack.c.l.b16 %v236
      %v294 = vunpack.c.l.b16 %v237
      %v295 = vunpack.c.l.b16 %v238
      %v296 = vunpack.c.l.b16 %v239
      %v297 = vunpack.c.l.b16 %v240
      %v298 = vunpack.c.l.b16 %v241
      %v299 = vunpack.c.l.b16 %v242
      %v300 = vunpack.c.l.b16 %v243
      %v301 = vunpack.c.l.b16 %v244
      %v302 = vunpack.c.l.b16 %v245
      %v303 = vunpack.c.l.b16 %v246
      %v304 = vunpack.c.l.b16 %v247
      %v305 = vunpack.c.l.b16 %v248
      %v306 = vunpack.c.l.b16 %v249
      %v307 = vunpack.c.l.b16 %v250
      %v308 = vunpack.c.l.b16 %v251
      %v309 = vunpack.c.l.b16 %v252
      %v310 = vpack.c.b16 %v286, %v285
      %v311 = vpack.c.b16 %v288, %v287
      %v312 = vpack.c.b16 %v290, %v289
      %v313 = vpack.c.b16 %v292, %v291
      %v314 = vpack.c.b16 %v294, %v293
      %v315 = vpack.c.b16 %v296, %v295
      %v316 = vpack.c.b16 %v298, %v297
      %v317 = vpack.c.b16 %v300, %v299
      %v318 = vpack.c.b16 %v302, %v301
      %v319 = vpack.c.b16 %v304, %v303
      %v320 = vpack.c.b16 %v306, %v305
      %v321 = vpack.c.b16 %v308, %v307
      %v322 = vpack.c.b16 %v309, %v309
      %vm335 = vcmask 572416
      %v337 = vsel %vm335, %v227, 0
      %vm339 = vcmask 1042432
      %v341 = vsel %vm339, %v322, 0
      %343 = vmatprep.subr.bf16.mxu0 0
      %344 = vmatpush1.bf16.msra.mxu0 %v317
      %345 = vmatprep.subr.bf16.mxu0 0
      %346 = vmatpush1.bf16.msra.mxu0 %v316
      %347 = vmatprep.subr.bf16.mxu0 0
      %348 = vmatpush1.bf16.msra.mxu0 %v315
      %349 = vmatprep.subr.bf16.mxu0 0
      %350 = vmatpush1.bf16.msra.mxu0 %v314
      %351 = vmatprep.subr.bf16.mxu0 0
      %352 = vmatpush1.bf16.msra.mxu0 %v313
      %353 = vmatprep.subr.bf16.mxu0 0
      %354 = vmatpush1.bf16.msra.mxu0 %v312
      %355 = vmatprep.subr.bf16.mxu0 0
      %356 = vmatpush1.bf16.msra.mxu0 %v311
      %357 = vmatprep.subr.bf16.mxu0 0
      %358 = vmatpush1.bf16.msra.mxu0 %v310
      %359 = vmatprep.subr.bf16.mxu0 0
      %360 = vmatpush2.bf16.msra.mxu0 0
      %361 = vmatprep.subr.bf16.mxu0 0
      %362 = vmatpush2.bf16.msra.mxu0 0
      %363 = vmatprep.subr.bf16.mxu0 0
      %364 = vmatpush2.bf16.msra.mxu0 0
      %365 = vmatprep.subr.bf16.mxu0 0
      %366 = vmatpush2.bf16.msra.mxu0 %v341
      %367 = vmatprep.subr.bf16.mxu0 0
      %368 = vmatpush2.bf16.msra.mxu0 %v321
      %369 = vmatprep.subr.bf16.mxu0 0
      %370 = vmatpush2.bf16.msra.mxu0 %v320
      %371 = vmatprep.subr.bf16.mxu0 0
      %372 = vmatpush2.bf16.msra.mxu0 %v319
      %373 = vmatprep.subr.bf16.mxu0 0
      %374 = vmatpush2.bf16.msra.mxu0 %v318
      %375 = vmatprep.mubr.bf16.mxu0 %v337
      %376 = vmatmul.mubr.bf16.gmra.mxu0 %v226
      %v377 = vpop.f32.mrf.mxu0
      %v378 = vadd.f32 %v258, %v377
      %v379 = vpop.f32.mrf.mxu0
      %v380 = vpop.f32.mrf.mxu0
      %v381 = vpop.f32.mrf.mxu0
      %382 = vdwg.mxu0
      %v383 = vmax.f32 %v378, 0.0
      %v384 = vpack.c.bf16 %v383, %v383
      %v385 = vld [vmem:[%s3] sm:$0xf]
      %v386 = vld [vmem:[%s3 + $0x4] sm:$0xf]
      %v387 = vld [vmem:[%s3 + $0x8] sm:$0xf]
      %v388 = vld [vmem:[%s3 + $0xc] sm:$0xf]
      %v389 = vld [vmem:[%s3 + $0x10] sm:$0xf]
      %v390 = vld [vmem:[%s3 + $0x14] sm:$0xf]
      %v391 = vld [vmem:[%s3 + $0x18] sm:$0xf]
      %v392 = vld [vmem:[%s3 + $0x1c] sm:$0xf]
      %v393 = vld [vmem:[%s3 + $0x20] sm:$0xf]
      %v394 = vld [vmem:[%s3 + $0x24] sm:$0xf]
      %v395 = vld [vmem:[%s3 + $0x28] sm:$0xf]
      %v396 = vld [vmem:[%s3 + $0x2c] sm:$0xf]
      %v397 = vld [vmem:[%s3 + $0x30] sm:$0xf]
      %v398 = vld [vmem:[%s3 + $0x34] sm:$0xf]
      %v399 = vld [vmem:[%s3 + $0x38] sm:$0xf]
      %v400 = vld [vmem:[%s3 + $0x3c] sm:$0xf]
      %v401 = vld [vmem:[%s4] sm:$0x1]
      %v403 = vlaneseq
      %v404 = vshrl.u32 %v403, 7
      %v405 = vsub.s32 0, %v404
      %v406 = vrot.slane %v401, %v405
      %v424 = vunpack.c.l.b16 %v385
      %v425 = vunpack.c.l.b16 %v386
      %v426 = vunpack.c.l.b16 %v387
      %v427 = vunpack.c.l.b16 %v388
      %v428 = vunpack.c.l.b16 %v389
      %v429 = vunpack.c.l.b16 %v390
      %v430 = vunpack.c.l.b16 %v391
      %v431 = vunpack.c.l.b16 %v392
      %v432 = vunpack.c.l.b16 %v393
      %v433 = vunpack.c.l.b16 %v394
      %v434 = vunpack.c.l.b16 %v395
      %v435 = vunpack.c.l.b16 %v396
      %v436 = vunpack.c.l.b16 %v397
      %v437 = vunpack.c.l.b16 %v398
      %v438 = vunpack.c.l.b16 %v399
      %v439 = vunpack.c.l.b16 %v400
      %v440 = vpack.c.b16 %v425, %v424
      %v441 = vpack.c.b16 %v427, %v426
      %v442 = vpack.c.b16 %v429, %v428
      %v443 = vpack.c.b16 %v431, %v430
      %v444 = vpack.c.b16 %v433, %v432
      %v445 = vpack.c.b16 %v435, %v434
      %v446 = vpack.c.b16 %v437, %v436
      %v447 = vpack.c.b16 %v439, %v438
      %456 = vmatprep.subr.bf16.mxu0 0
      %457 = vmatpush1.bf16.msra.mxu0 %v447
      %458 = vmatprep.subr.bf16.mxu0 0
      %459 = vmatpush1.bf16.msra.mxu0 %v446
      %460 = vmatprep.subr.bf16.mxu0 0
      %461 = vmatpush1.bf16.msra.mxu0 %v445
      %462 = vmatprep.subr.bf16.mxu0 0
      %463 = vmatpush1.bf16.msra.mxu0 %v444
      %464 = vmatprep.subr.bf16.mxu0 0
      %465 = vmatpush1.bf16.msra.mxu0 %v443
      %466 = vmatprep.subr.bf16.mxu0 0
      %467 = vmatpush1.bf16.msra.mxu0 %v442
      %468 = vmatprep.subr.bf16.mxu0 0
      %469 = vmatpush1.bf16.msra.mxu0 %v441
      %470 = vmatprep.subr.bf16.mxu0 0
      %471 = vmatpush1.bf16.msra.mxu0 %v440
      %472 = vmatprep.subr.bf16.mxu0 0
      %473 = vmatpush2.bf16.msra.mxu0 0
      %474 = vmatprep.subr.bf16.mxu0 0
      %475 = vmatpush2.bf16.msra.mxu0 0
      %476 = vmatprep.subr.bf16.mxu0 0
      %477 = vmatpush2.bf16.msra.mxu0 0
      %478 = vmatprep.subr.bf16.mxu0 0
      %479 = vmatpush2.bf16.msra.mxu0 0
      %480 = vmatprep.subr.bf16.mxu0 0
      %481 = vmatpush2.bf16.msra.mxu0 0
      %482 = vmatprep.subr.bf16.mxu0 0
      %483 = vmatpush2.bf16.msra.mxu0 0
      %484 = vmatprep.subr.bf16.mxu0 0
      %485 = vmatpush2.bf16.msra.mxu0 0
      %486 = vmatprep.subr.bf16.mxu0 0
      %487 = vmatpush2.bf16.msra.mxu0 0
      %488 = vmatprep.mubr.bf16.mxu0 0
      %489 = vmatmul.mubr.bf16.gmra.mxu0 %v384
      %v490 = vpop.f32.mrf.mxu0
      %v491 = vadd.f32 %v406, %v490
      %v492 = vpop.f32.mrf.mxu0
      %v493 = vpop.f32.mrf.mxu0
      %v494 = vpop.f32.mrf.mxu0
      %495 = vdwg.mxu0
      %496 = vmax.xlane.f32.xlu0 %v491
      %v497 = vpop.xlane.xlu0 %496
      %v498 = vsub.f32 %v491, %v497
      %v499 = vmul.f32 %v498, 1.442695
      %v500 = vpow.pop %v499
      %501 = vadd.xlane.f32.xlu0 %v500
      %v502 = vpop.xlane.xlu0 %501
      %v503 = vrcp.pop %v502
      %v504 = vmul.f32 %v500, %v503
      %vm505 = vcmask 64512
      %506 = vst.msk [vmem:[%s222] sm:$0xff] %vm505, %v504
      %p507 = scmp.lt.s32.totalorder %s16, 2
      %s508 = scalar_select %p507, %s16, 2
      %s509 = smul.addr %s508, 8
      %s510 = scalar_lea.vmem %s5, %s509
      // Predicated region
      $region41: #{reinforce_net_forward.1} parent=39 // pred_check
        %p511 = pneg %p144
      $region42: #{reinforce_net_forward.1} parent=39 // pred_check_branch
        %513 = sbr.rel (%p511) target = $region44
      $region43: #{reinforce_net_forward.1} parent=39 // pred_region
        _
      $region44: #{reinforce_net_forward.1} parent=39 // pred_fallthru
        _
    $region40: #{reinforce_net_forward.1} parent=5 // pred_fallthru
      _
    %p514 = scmp.le.s32.totalorder 2, %s11
    // Predicated region
    $region45: #{reinforce_net_forward.1} parent=5 // pred_check
      %p515 = pneg %p514
    $region46: #{reinforce_net_forward.1} parent=5 // pred_check_branch
      %517 = sbr.rel (%p515) target = $region48
    $region47: #{reinforce_net_forward.1} parent=5 // pred_region
      %s518 = ssub.s32 %s11, 2
      // Predicated region
      $region49: #{reinforce_net_forward.1} parent=47 // pred_check
        %p519 = pneg %p150
      $region50: #{reinforce_net_forward.1} parent=47 // pred_check_branch
        %521 = sbr.rel (%p519) target = $region52
      $region51: #{reinforce_net_forward.1} parent=47 // pred_region
        %p522 = scmp.lt.s32.totalorder %s17, 2
        %s523 = scalar_select %p522, %s17, 2
        %s524 = smul.addr %s523, 8
        %s525 = scalar_lea.vmem %s5, %s524
      $region52: #{reinforce_net_forward.1} parent=47 // pred_fallthru
        _
    $region48: #{reinforce_net_forward.1} parent=5 // pred_fallthru
      _
  $region6: #{reinforce_net_forward.1} parent=0 // loop_footer
    %s15 = sadd.s32 1, %s11
  $region7: #{reinforce_net_forward.1} parent=0 // loop_footer_branch
    %10 = sbr.rel target = $region3
  $region8: #{reinforce_net_forward.1} parent=0 // loop_exit
    _

</llo_original>
